<compile_context>
chip_gen: v7x
topology: tpu7x:2x2x1
jax: 0.10.0
libtpu: 0.0.40
codegen_flags: <defaults>
</compile_context>

<pallas_src>
import functools

import jax
import jax.numpy as jnp
from jax.experimental import pallas as pl
from jax.experimental.pallas import tpu as pltpu


def _round_up(x, m):
    return (x + m - 1) // m * m


def _cross_kernel(x_ref, w_ref, b_ref, o_ref, *, num_layers, group_size):
    # x_ref: (tile, PD)  -- PD = P * D lanes, P original rows packed per lane-row
    # w_ref: (L, PD)     -- per-layer weights, each tiled P times along lanes
    # b_ref: (L, PD)     -- per-layer biases,  each tiled P times along lanes
    x0 = x_ref[...].astype(jnp.float32)
    W = w_ref[...].astype(jnp.float32)
    B = b_ref[...].astype(jnp.float32)
    pd = x0.shape[-1]

    # Block-diagonal 0/1 matrix: seg[i, j] = 1 iff lanes i and j belong to the
    # same packed row (same group of `group_size` lanes).  prod @ seg performs
    # the per-row dot product AND broadcasts it back across that row's lanes.
    if group_size == pd:
        seg = jnp.ones((pd, pd), dtype=jnp.bfloat16)
    else:
        shift = int(group_size).bit_length() - 1  # group_size is 2**shift here
        gi = jax.lax.broadcasted_iota(jnp.int32, (pd, pd), 0) >> shift
        gj = jax.lax.broadcasted_iota(jnp.int32, (pd, pd), 1) >> shift
        seg = jnp.where(gi == gj, 1.0, 0.0).astype(jnp.bfloat16)

    x = x0
    for l in range(num_layers):  # num_layers is small & static -> unrolled
        w_l = W[l:l + 1, :]      # (1, PD)
        b_l = B[l:l + 1, :]      # (1, PD)
        prod = x * w_l           # (tile, PD) f32
        # hi/lo bf16 split keeps the MXU reduce ~f32-accurate on the fast
        # native bf16 path (seg is exactly representable in bf16).
        hi = prod.astype(jnp.bfloat16)
        lo = (prod - hi.astype(jnp.float32)).astype(jnp.bfloat16)
        xw = (jnp.dot(hi, seg, preferred_element_type=jnp.float32)
              + jnp.dot(lo, seg, preferred_element_type=jnp.float32))
        x = x0 * xw + b_l + x    # matches: x0 * w_l(x) + b_l + x
    o_ref[...] = x.astype(o_ref.dtype)


def cross_network(x, W, B, *, tm=512):
    """DCN CrossNetwork forward.

    x: (batch, num_fields, D); W, B: (num_layers, D).
    Returns an array with the same shape/dtype as x.
    tm = packed-row tile (each packed row holds 128 // D original rows).
    """
    batch, num_fields, D = x.shape
    L = W.shape[0]
    assert W.shape == (L, D) and B.shape == (L, D)

    # ---- lane-dense packing: fold P rows into one 128-wide lane row ---------
    if D < 128 and 128 % D == 0:
        P = 128 // D
    else:
        P = 1                    # fallback: D already >= 128 or not packable
    PD = P * D

    M = batch * num_fields
    x2d = x.reshape(M, D)

    M_p = _round_up(M, P)
    if M_p != M:
        x2d = jnp.pad(x2d, ((0, M_p - M), (0, 0)))
    Mg = M_p // P
    xp = x2d.reshape(Mg, PD)     # contiguous reshape -> no data movement

    Wp = jnp.tile(W, (1, P))     # (L, PD): w_l replicated per packed row
    Bp = jnp.tile(B, (1, P))

    # ---- row tile: large (this op is HBM-bound), multiple of 8 sublanes -----
    tile = max(8, min(int(tm), _round_up(Mg, 8)))
    tile = _round_up(tile, 8)
    Mg_pad = _round_up(Mg, tile)          # pad the tail instead of shrinking tile
    if Mg_pad != Mg:
        xp = jnp.pad(xp, ((0, Mg_pad - Mg), (0, 0)))
    grid = (Mg_pad // tile,)

    out = pl.pallas_call(
        functools.partial(_cross_kernel, num_layers=L, group_size=D),
        out_shape=jax.ShapeDtypeStruct((Mg_pad, PD), x.dtype),
        grid_spec=pltpu.PrefetchScalarGridSpec(
            num_scalar_prefetch=0,
            grid=grid,
            in_specs=[
                pl.BlockSpec((tile, PD), lambda i: (i, 0)),  # x rows (pipelined)
                pl.BlockSpec((L, PD), lambda i: (0, 0)),     # weights (constant block)
                pl.BlockSpec((L, PD), lambda i: (0, 0)),     # biases  (constant block)
            ],
            out_specs=pl.BlockSpec((tile, PD), lambda i: (i, 0)),
        ),
        compiler_params=pltpu.CompilerParams(
            dimension_semantics=("parallel",),  # lets v7x shard steps across its 2 TCs
        ),
    )(xp, Wp, Bp)

    out = out[:Mg].reshape(M_p, D)[:M]
    return out.reshape(batch, num_fields, D)


def cross_network_ref(x, W, B):
    """Pure-JAX reference matching the PyTorch forward exactly."""
    x0 = x
    out = x
    for l in range(W.shape[0]):
        xw = jnp.sum(out * W[l][None, None, :], axis=-1, keepdims=True)  # Linear(D,1)
        out = x0 * xw + B[l][None, None, :] + out
    return out


def _xavier_uniform(key, shape, fan_in, fan_out, dtype=jnp.float32):
    bound = (6.0 / (fan_in + fan_out)) ** 0.5
    return jax.random.uniform(key, shape, dtype=dtype, minval=-bound, maxval=bound)


if __name__ == "__main__":
    batch, num_fields, embed_dim = 2, 8, 32
    num_layers = 3

    key = jax.random.PRNGKey(0)
    kx, kw, kb = jax.random.split(key, 3)

    x = jax.random.normal(kx, (batch, num_fields, embed_dim), dtype=jnp.float32)

    # w[i]: torch.nn.Linear(D, 1, bias=False).weight -> (1, D); xavier(fan_in=D, fan_out=1).
    W = _xavier_uniform(kw, (num_layers, embed_dim), fan_in=embed_dim, fan_out=1)
    # b[i]: Parameter (D, 1); xavier(fan_in=1, fan_out=D); stored squeezed to (L, D).
    B = _xavier_uniform(kb, (num_layers, embed_dim), fan_in=1, fan_out=embed_dim)

    out = cross_network(x, W, B)
    out = jax.block_until_ready(out)

    ref = cross_network_ref(x, W, B)
    assert out.shape == (batch, num_fields, embed_dim)
    assert jnp.allclose(out, ref, atol=1e-4, rtol=1e-4), "mismatch vs reference"

    print("KERNEL_OK")
</pallas_src>

<mosaic_0001>
module attributes {stable_mosaic.version = 11 : i64} {
  func.func @_cross_kernel(%arg0: i32, %arg1: memref<8x128xf32, #tpu.memory_space<vmem>>, %arg2: memref<3x128xf32, #tpu.memory_space<vmem>>, %arg3: memref<3x128xf32, #tpu.memory_space<vmem>>, %arg4: memref<8x128xf32, #tpu.memory_space<vmem>>) attributes {dimension_semantics = [#tpu.dimension_semantics<parallel>], iteration_bounds = array<i64: 1>, scalar_prefetch = 0 : i64, scratch_operands = 0 : i64, tpu.core_type = #tpu.core_type<tc>, window_params = [{transform_indices = @transform_0, window_bounds = array<i64: 8, 128>}, {pipeline_mode = #tpu.pipeline_mode<synchronous>, transform_indices = @transform_1, window_bounds = array<i64: 3, 128>}, {pipeline_mode = #tpu.pipeline_mode<synchronous>, transform_indices = @transform_2, window_bounds = array<i64: 3, 128>}, {transform_indices = @transform_3, window_bounds = array<i64: 8, 128>}]} {
    %c0 = arith.constant 0 : index
    %c0_0 = arith.constant 0 : index
    %0 = vector.load %arg1[%c0, %c0_0] : memref<8x128xf32, #tpu.memory_space<vmem>>, vector<8x128xf32>
    %c0_1 = arith.constant 0 : index
    %c0_2 = arith.constant 0 : index
    %1 = vector.load %arg2[%c0_1, %c0_2] : memref<3x128xf32, #tpu.memory_space<vmem>>, vector<3x128xf32>
    %c0_3 = arith.constant 0 : index
    %c0_4 = arith.constant 0 : index
    %2 = vector.load %arg3[%c0_3, %c0_4] : memref<3x128xf32, #tpu.memory_space<vmem>>, vector<3x128xf32>
    %3 = tpu.iota {dimensions = array<i32: 0>} : vector<128x128xi32>
    %c5_i32 = arith.constant 5 : i32
    %4 = vector.broadcast %c5_i32 : i32 to vector<128x128xi32>
    %5 = arith.shrsi %3, %4 : vector<128x128xi32>
    %6 = tpu.iota {dimensions = array<i32: 1>} : vector<128x128xi32>
    %c5_i32_5 = arith.constant 5 : i32
    %7 = vector.broadcast %c5_i32_5 : i32 to vector<128x128xi32>
    %8 = arith.shrsi %6, %7 : vector<128x128xi32>
    %9 = arith.cmpi eq, %5, %8 : vector<128x128xi32>
    %cst = arith.constant 1.000000e+00 : f32
    %cst_6 = arith.constant 0.000000e+00 : f32
    %10 = vector.broadcast %cst : f32 to vector<128x128xf32>
    %11 = vector.broadcast %cst_6 : f32 to vector<128x128xf32>
    %12 = arith.select %9, %10, %11 : vector<128x128xi1>, vector<128x128xf32>
    %13 = arith.truncf %12 : vector<128x128xf32> to vector<128x128xbf16>
    %14 = vector.extract_strided_slice %1 {offsets = [0, 0], sizes = [1, 128], strides = [1, 1]} : vector<3x128xf32> to vector<1x128xf32>
    %15 = vector.extract_strided_slice %2 {offsets = [0, 0], sizes = [1, 128], strides = [1, 1]} : vector<3x128xf32> to vector<1x128xf32>
    %16 = vector.broadcast %14 : vector<1x128xf32> to vector<8x128xf32>
    %17 = arith.mulf %0, %16 : vector<8x128xf32>
    %18 = arith.truncf %17 : vector<8x128xf32> to vector<8x128xbf16>
    %19 = arith.extf %18 : vector<8x128xbf16> to vector<8x128xf32>
    %20 = arith.subf %17, %19 : vector<8x128xf32>
    %21 = arith.truncf %20 : vector<8x128xf32> to vector<8x128xbf16>
    %cst_7 = arith.constant dense<0.000000e+00> : vector<8x128xf32>
    %22 = tpu.matmul %18, %13, %cst_7 {dimension_numbers = #tpu.dot_dimension_numbers<[1], [0], [0], [1], [0, 0, 1, 1], [], []>} : vector<8x128xbf16>, vector<128x128xbf16>, vector<8x128xf32> -> vector<8x128xf32>
    %cst_8 = arith.constant dense<0.000000e+00> : vector<8x128xf32>
    %23 = tpu.matmul %21, %13, %cst_8 {dimension_numbers = #tpu.dot_dimension_numbers<[1], [0], [0], [1], [0, 0, 1, 1], [], []>} : vector<8x128xbf16>, vector<128x128xbf16>, vector<8x128xf32> -> vector<8x128xf32>
    %24 = arith.addf %22, %23 : vector<8x128xf32>
    %25 = arith.mulf %0, %24 : vector<8x128xf32>
    %26 = vector.broadcast %15 : vector<1x128xf32> to vector<8x128xf32>
    %27 = arith.addf %25, %26 : vector<8x128xf32>
    %28 = arith.addf %27, %0 : vector<8x128xf32>
    %29 = vector.extract_strided_slice %1 {offsets = [1, 0], sizes = [1, 128], strides = [1, 1]} : vector<3x128xf32> to vector<1x128xf32>
    %30 = vector.extract_strided_slice %2 {offsets = [1, 0], sizes = [1, 128], strides = [1, 1]} : vector<3x128xf32> to vector<1x128xf32>
    %31 = vector.broadcast %29 : vector<1x128xf32> to vector<8x128xf32>
    %32 = arith.mulf %28, %31 : vector<8x128xf32>
    %33 = arith.truncf %32 : vector<8x128xf32> to vector<8x128xbf16>
    %34 = arith.extf %33 : vector<8x128xbf16> to vector<8x128xf32>
    %35 = arith.subf %32, %34 : vector<8x128xf32>
    %36 = arith.truncf %35 : vector<8x128xf32> to vector<8x128xbf16>
    %cst_9 = arith.constant dense<0.000000e+00> : vector<8x128xf32>
    %37 = tpu.matmul %33, %13, %cst_9 {dimension_numbers = #tpu.dot_dimension_numbers<[1], [0], [0], [1], [0, 0, 1, 1], [], []>} : vector<8x128xbf16>, vector<128x128xbf16>, vector<8x128xf32> -> vector<8x128xf32>
    %cst_10 = arith.constant dense<0.000000e+00> : vector<8x128xf32>
    %38 = tpu.matmul %36, %13, %cst_10 {dimension_numbers = #tpu.dot_dimension_numbers<[1], [0], [0], [1], [0, 0, 1, 1], [], []>} : vector<8x128xbf16>, vector<128x128xbf16>, vector<8x128xf32> -> vector<8x128xf32>
    %39 = arith.addf %37, %38 : vector<8x128xf32>
    %40 = arith.mulf %0, %39 : vector<8x128xf32>
    %41 = vector.broadcast %30 : vector<1x128xf32> to vector<8x128xf32>
    %42 = arith.addf %40, %41 : vector<8x128xf32>
    %43 = arith.addf %42, %28 : vector<8x128xf32>
    %44 = vector.extract_strided_slice %1 {offsets = [2, 0], sizes = [1, 128], strides = [1, 1]} : vector<3x128xf32> to vector<1x128xf32>
    %45 = vector.extract_strided_slice %2 {offsets = [2, 0], sizes = [1, 128], strides = [1, 1]} : vector<3x128xf32> to vector<1x128xf32>
    %46 = vector.broadcast %44 : vector<1x128xf32> to vector<8x128xf32>
    %47 = arith.mulf %43, %46 : vector<8x128xf32>
    %48 = arith.truncf %47 : vector<8x128xf32> to vector<8x128xbf16>
    %49 = arith.extf %48 : vector<8x128xbf16> to vector<8x128xf32>
    %50 = arith.subf %47, %49 : vector<8x128xf32>
    %51 = arith.truncf %50 : vector<8x128xf32> to vector<8x128xbf16>
    %cst_11 = arith.constant dense<0.000000e+00> : vector<8x128xf32>
    %52 = tpu.matmul %48, %13, %cst_11 {dimension_numbers = #tpu.dot_dimension_numbers<[1], [0], [0], [1], [0, 0, 1, 1], [], []>} : vector<8x128xbf16>, vector<128x128xbf16>, vector<8x128xf32> -> vector<8x128xf32>
    %cst_12 = arith.constant dense<0.000000e+00> : vector<8x128xf32>
    %53 = tpu.matmul %51, %13, %cst_12 {dimension_numbers = #tpu.dot_dimension_numbers<[1], [0], [0], [1], [0, 0, 1, 1], [], []>} : vector<8x128xbf16>, vector<128x128xbf16>, vector<8x128xf32> -> vector<8x128xf32>
    %54 = arith.addf %52, %53 : vector<8x128xf32>
    %55 = arith.mulf %0, %54 : vector<8x128xf32>
    %56 = vector.broadcast %45 : vector<1x128xf32> to vector<8x128xf32>
    %57 = arith.addf %55, %56 : vector<8x128xf32>
    %58 = arith.addf %57, %43 : vector<8x128xf32>
    %c0_13 = arith.constant 0 : index
    %c0_14 = arith.constant 0 : index
    %59 = vector.load %arg4[%c0_13, %c0_14] : memref<8x128xf32, #tpu.memory_space<vmem>>, vector<8x128xf32>
    tpu.vector_store %arg4[%c0_13, %c0_14], %58 {strides = array<i32>} : memref<8x128xf32, #tpu.memory_space<vmem>>, vector<8x128xf32>,
    return
  }
  func.func @transform_0(%arg0: i32) -> (i32, i32) {
    %c0_i32 = arith.constant 0 : i32
    %c0_i32_0 = arith.constant 0 : i32
    return %arg0, %c0_i32 : i32, i32
  }
  func.func @transform_1(%arg0: i32) -> (i32, i32) {
    %c0_i32 = arith.constant 0 : i32
    %c0_i32_0 = arith.constant 0 : i32
    %c0_i32_1 = arith.constant 0 : i32
    return %c0_i32, %c0_i32_0 : i32, i32
  }
  func.func @transform_2(%arg0: i32) -> (i32, i32) {
    %c0_i32 = arith.constant 0 : i32
    %c0_i32_0 = arith.constant 0 : i32
    %c0_i32_1 = arith.constant 0 : i32
    return %c0_i32, %c0_i32_0 : i32, i32
  }
  func.func @transform_3(%arg0: i32) -> (i32, i32) {
    %c0_i32 = arith.constant 0 : i32
    %c0_i32_0 = arith.constant 0 : i32
    return %arg0, %c0_i32 : i32, i32
  }
}

</mosaic_0001>

<llo_original>
// kernel: tpu_custom_call.1
$region0: #{tpu_custom_call.1}
  #allocation0 [shape = 'u32[]', space=smem, size = 0x4, offset = 0x4, fixed_abs, tag = 'smem constant byte address 0x4 - core index']
  #allocation1 [shape = 'u32[144,128]{1,0:T(1,128)}', space=vmem, size = 0x12000, scoped, tag = 'internal scratch']
  %s0 = inlined_call_operand.hbm [shape: f32[8,128], index: 0, kind: input, shape index: {}]
  %s1 = inlined_call_operand.hbm [shape: f32[3,128], index: 1, kind: input, shape index: {}]
  %s2 = inlined_call_operand.vmem [shape: f32[3,128], index: 2, kind: input, shape index: {}]
  %s3 = inlined_call_operand.hbm [shape: f32[8,128], index: 3, kind: output, shape index: {}]
  %s4 = sld [smem:[#allocation0]]
  $region30: #{tpu_custom_call.1} parent=0
    _
  %s6 = ssub.s32 1, %s4
  %s7 = scalar_select 0, %s6, %s4
  $region1: #{tpu_custom_call.1} parent=0
    #allocation2 [shape = 'u8[4096]{0}', space=vmem, size = 0x1000, scoped, tag = 'input window, operand 0, single buffered']
    #allocation3 [shape = 's32[1]{0}', space=sflag, size = 0x4, scoped, tag = 'scoped memory for tpu_custom_call.1']
    #allocation4 [shape = 's32[1]{0}', space=sflag, size = 0x4, scoped, tag = 'scoped memory for tpu_custom_call.1']
    #allocation5 [shape = 'u8[2048]{0}', space=vmem, size = 0x800, scoped, tag = 'input window, operand 1, single buffered']
    #allocation6 [shape = 's32[1]{0}', space=sflag, size = 0x4, scoped, tag = 'scoped memory for tpu_custom_call.1']
    #allocation7 [shape = 'u8[4096]{0}', space=vmem, size = 0x1000, scoped, tag = 'output window, operand 0, single buffered']
    %8 = vsyncpa [#allocation3], 0
    %9 = vsyncpa [#allocation6], 0
    %10 = vsyncpa [#allocation4], 0
    // Predicated region
    $region2: #{tpu_custom_call.1} parent=1 // pred_check
      _
    $region3: #{tpu_custom_call.1} parent=1 // pred_check_branch
      %12 = sbr.rel (0) target = $region5
    $region4: #{tpu_custom_call.1} parent=1 // pred_region
      %s14 = ssub.s32 128, 128
      %15 = vsyncadd [#allocation3], %s14
      %s17 = sshll.u32 [#allocation2], 4
      %s18 = int_to_ptr.vmem [resolvable:$true] %s17
      %20 = dma.hbm_to_vmem [thread:$0]  %s0, 128, %s18, [#allocation3]
    $region5: #{tpu_custom_call.1} parent=1 // pred_fallthru
      _
    // Predicated region
    $region6: #{tpu_custom_call.1} parent=1 // pred_check
      _
    $region7: #{tpu_custom_call.1} parent=1 // pred_check_branch
      %22 = sbr.rel (0) target = $region9
    $region8: #{tpu_custom_call.1} parent=1 // pred_region
      %s24 = ssub.s32 64, 64
      %25 = vsyncadd [#allocation6], %s24
      %s27 = sshll.u32 [#allocation5], 4
      %s28 = int_to_ptr.vmem [resolvable:$true] %s27
      %30 = dma.hbm_to_vmem [thread:$0]  %s1, 64, %s28, [#allocation6]
    $region9: #{tpu_custom_call.1} parent=1 // pred_fallthru
      _
    // Predicated region
    $region10: #{tpu_custom_call.1} parent=1 // pred_check
      _
    $region11: #{tpu_custom_call.1} parent=1 // pred_check_branch
      %32 = sbr.rel (0) target = $region13
    $region12: #{tpu_custom_call.1} parent=1 // pred_region
      _
    $region13: #{tpu_custom_call.1} parent=1 // pred_fallthru
      _
    // Predicated region
    $region14: #{tpu_custom_call.1} parent=1 // pred_check
      _
    $region15: #{tpu_custom_call.1} parent=1 // pred_check_branch
      %34 = sbr.rel (0) target = $region17
    $region16: #{tpu_custom_call.1} parent=1 // pred_region
      %35 = dma.done [#allocation3], 128
    $region17: #{tpu_custom_call.1} parent=1 // pred_fallthru
      _
    // Predicated region
    $region18: #{tpu_custom_call.1} parent=1 // pred_check
      _
    $region19: #{tpu_custom_call.1} parent=1 // pred_check_branch
      %37 = sbr.rel (0) target = $region21
    $region20: #{tpu_custom_call.1} parent=1 // pred_region
      %38 = dma.done [#allocation6], 64
    $region21: #{tpu_custom_call.1} parent=1 // pred_fallthru
      _
    %v40 = vld [vmem:[#allocation2] sm:$0xff]
    %v41 = vld [vmem:[#allocation5] sm:$0x7]
    %v42 = vld [vmem:[%s2] sm:$0x7]
    %v43 = vlaneseq
    %v44 = vshrl.u32 %v43, 7
    %v45 = vadd.s32 %v44, 8
    %v46 = vadd.s32 %v44, 16
    %v47 = vadd.s32 %v44, 24
    %v48 = vadd.s32 %v44, 32
    %v49 = vadd.s32 %v44, 40
    %v50 = vadd.s32 %v44, 48
    %v51 = vadd.s32 %v44, 56
    %v52 = vadd.s32 %v44, 64
    %v53 = vadd.s32 %v44, 72
    %v54 = vadd.s32 %v44, 80
    %v55 = vadd.s32 %v44, 88
    %v56 = vadd.s32 %v44, 96
    %v57 = vadd.s32 %v44, 104
    %v58 = vadd.s32 %v44, 112
    %v59 = vadd.s32 %v44, 120
    %v60 = vshra.s32 %v44, 5
    %v61 = vshra.s32 %v45, 5
    %v62 = vshra.s32 %v46, 5
    %v63 = vshra.s32 %v47, 5
    %v64 = vshra.s32 %v48, 5
    %v65 = vshra.s32 %v49, 5
    %v66 = vshra.s32 %v50, 5
    %v67 = vshra.s32 %v51, 5
    %v68 = vshra.s32 %v52, 5
    %v69 = vshra.s32 %v53, 5
    %v70 = vshra.s32 %v54, 5
    %v71 = vshra.s32 %v55, 5
    %v72 = vshra.s32 %v56, 5
    %v73 = vshra.s32 %v57, 5
    %v74 = vshra.s32 %v58, 5
    %v75 = vshra.s32 %v59, 5
    %v76 = vlaneseq
    %v77 = vand.u32 %v76, 127
    %v78 = vshra.s32 %v77, 5
    %vm79 = vcmp.eq.s32.totalorder %v60, %v78
    %vm80 = vcmp.eq.s32.totalorder %v61, %v78
    %vm81 = vcmp.eq.s32.totalorder %v62, %v78
    %vm82 = vcmp.eq.s32.totalorder %v63, %v78
    %vm83 = vcmp.eq.s32.totalorder %v64, %v78
    %vm84 = vcmp.eq.s32.totalorder %v65, %v78
    %vm85 = vcmp.eq.s32.totalorder %v66, %v78
    %vm86 = vcmp.eq.s32.totalorder %v67, %v78
    %vm87 = vcmp.eq.s32.totalorder %v68, %v78
    %vm88 = vcmp.eq.s32.totalorder %v69, %v78
    %vm89 = vcmp.eq.s32.totalorder %v70, %v78
    %vm90 = vcmp.eq.s32.totalorder %v71, %v78
    %vm91 = vcmp.eq.s32.totalorder %v72, %v78
    %vm92 = vcmp.eq.s32.totalorder %v73, %v78
    %vm93 = vcmp.eq.s32.totalorder %v74, %v78
    %vm94 = vcmp.eq.s32.totalorder %v75, %v78
    %v95 = vsel %vm79, 1.0, 0.0
    %v96 = vsel %vm80, 1.0, 0.0
    %v97 = vsel %vm81, 1.0, 0.0
    %v98 = vsel %vm82, 1.0, 0.0
    %v99 = vsel %vm83, 1.0, 0.0
    %v100 = vsel %vm84, 1.0, 0.0
    %v101 = vsel %vm85, 1.0, 0.0
    %v102 = vsel %vm86, 1.0, 0.0
    %v103 = vsel %vm87, 1.0, 0.0
    %v104 = vsel %vm88, 1.0, 0.0
    %v105 = vsel %vm89, 1.0, 0.0
    %v106 = vsel %vm90, 1.0, 0.0
    %v107 = vsel %vm91, 1.0, 0.0
    %v108 = vsel %vm92, 1.0, 0.0
    %v109 = vsel %vm93, 1.0, 0.0
    %v110 = vsel %vm94, 1.0, 0.0
    %v111 = vpack.c.bf16 %v96, %v95
    %v112 = vpack.c.bf16 %v98, %v97
    %v113 = vpack.c.bf16 %v100, %v99
    %v114 = vpack.c.bf16 %v102, %v101
    %v115 = vpack.c.bf16 %v104, %v103
    %v116 = vpack.c.bf16 %v106, %v105
    %v117 = vpack.c.bf16 %v108, %v107
    %v118 = vpack.c.bf16 %v110, %v109
    %v119 = vlaneseq
    %v120 = vshrl.u32 %v119, 7
    %v121 = vsub.s32 0, %v120
    %v122 = vrot.slane %v41, %v121
    %v123 = vmul.f32 %v40, %v122
    %v124 = vpack.c.bf16 %v123, %v123
    %v125 = vunpack.c.l.bf16 %v124
    %v126 = vsub.f32 %v123, %v125
    %v127 = vpack.c.bf16 %v126, %v126
    %128 = vmatprep.subr.bf16.mxu0 0
    %129 = vmatpush1.bf16.msra.mxu0 %v111
    %130 = vmatprep.subr.bf16.mxu0 0
    %131 = vmatpush1.bf16.msra.mxu0 %v112
    %132 = vmatprep.subr.bf16.mxu0 0
    %133 = vmatpush1.bf16.msra.mxu0 %v113
    %134 = vmatprep.subr.bf16.mxu0 0
    %135 = vmatpush1.bf16.msra.mxu0 %v114
    %136 = vmatprep.subr.bf16.mxu0 0
    %137 = vmatpush1.bf16.msra.mxu0 %v115
    %138 = vmatprep.subr.bf16.mxu0 0
    %139 = vmatpush1.bf16.msra.mxu0 %v116
    %140 = vmatprep.subr.bf16.mxu0 0
    %141 = vmatpush1.bf16.msra.mxu0 %v117
    %142 = vmatprep.subr.bf16.mxu0 0
    %143 = vmatpush1.bf16.msra.mxu0 %v118
    %144 = vmatprep.subr.bf16.mxu0 0
    %145 = vmatpush1.bf16.msra.mxu0 0
    %146 = vmatprep.subr.bf16.mxu0 0
    %147 = vmatpush1.bf16.msra.mxu0 0
    %148 = vmatprep.subr.bf16.mxu0 0
    %149 = vmatpush1.bf16.msra.mxu0 0
    %150 = vmatprep.subr.bf16.mxu0 0
    %151 = vmatpush1.bf16.msra.mxu0 0
    %152 = vmatprep.subr.bf16.mxu0 0
    %153 = vmatpush1.bf16.msra.mxu0 0
    %154 = vmatprep.subr.bf16.mxu0 0
    %155 = vmatpush1.bf16.msra.mxu0 0
    %156 = vmatprep.subr.bf16.mxu0 0
    %157 = vmatpush1.bf16.msra.mxu0 0
    %158 = vmatprep.subr.bf16.mxu0 0
    %159 = vmatpush1.bf16.msra.mxu0 0
    %160 = vmatprep.mubr.bf16.mxu0 0
    %161 = vmatmul.mubr.bf16.gmra.mrb[0].mxu0 %v127
    %v162 = vpop.f32.mrb[0].mxu0
    %v163 = vadd.f32 0.0, %v162
    %v164 = vpop.f32.mrb[0].mxu0
    %v165 = vpop.f32.mrb[0].mxu0
    %v166 = vpop.f32.mrb[0].mxu0
    %167 = vdwg.mxu0
    %168 = vmatprep.subr.bf16.mxu0 0
    %169 = vmatpush1.bf16.msra.mxu0 %v111
    %170 = vmatprep.subr.bf16.mxu0 0
    %171 = vmatpush1.bf16.msra.mxu0 %v112
    %172 = vmatprep.subr.bf16.mxu0 0
    %173 = vmatpush1.bf16.msra.mxu0 %v113
    %174 = vmatprep.subr.bf16.mxu0 0
    %175 = vmatpush1.bf16.msra.mxu0 %v114
    %176 = vmatprep.subr.bf16.mxu0 0
    %177 = vmatpush1.bf16.msra.mxu0 %v115
    %178 = vmatprep.subr.bf16.mxu0 0
    %179 = vmatpush1.bf16.msra.mxu0 %v116
    %180 = vmatprep.subr.bf16.mxu0 0
    %181 = vmatpush1.bf16.msra.mxu0 %v117
    %182 = vmatprep.subr.bf16.mxu0 0
    %183 = vmatpush1.bf16.msra.mxu0 %v118
    %184 = vmatprep.subr.bf16.mxu0 0
    %185 = vmatpush1.bf16.msra.mxu0 0
    %186 = vmatprep.subr.bf16.mxu0 0
    %187 = vmatpush1.bf16.msra.mxu0 0
    %188 = vmatprep.subr.bf16.mxu0 0
    %189 = vmatpush1.bf16.msra.mxu0 0
    %190 = vmatprep.subr.bf16.mxu0 0
    %191 = vmatpush1.bf16.msra.mxu0 0
    %192 = vmatprep.subr.bf16.mxu0 0
    %193 = vmatpush1.bf16.msra.mxu0 0
    %194 = vmatprep.subr.bf16.mxu0 0
    %195 = vmatpush1.bf16.msra.mxu0 0
    %196 = vmatprep.subr.bf16.mxu0 0
    %197 = vmatpush1.bf16.msra.mxu0 0
    %198 = vmatprep.subr.bf16.mxu0 0
    %199 = vmatpush1.bf16.msra.mxu0 0
    %200 = vmatprep.mubr.bf16.mxu0 0
    %201 = vmatmul.mubr.bf16.gmra.mrb[0].mxu0 %v124
    %v202 = vpop.f32.mrb[0].mxu0
    %v203 = vadd.f32 %v163, %v202
    %v204 = vpop.f32.mrb[0].mxu0
    %v205 = vpop.f32.mrb[0].mxu0
    %v206 = vpop.f32.mrb[0].mxu0
    %207 = vdwg.mxu0
    %v208 = vmul.f32 %v40, %v203
    %v209 = vlaneseq
    %v210 = vshrl.u32 %v209, 7
    %v211 = vsub.s32 0, %v210
    %v212 = vrot.slane %v42, %v211
    %v213 = vadd.f32 %v208, %v212
    %v214 = vadd.f32 %v213, %v40
    %v215 = vlaneseq
    %v216 = vshrl.u32 %v215, 7
    %v217 = vsub.s32 1, %v216
    %v218 = vrot.slane %v41, %v217
    %v219 = vmul.f32 %v214, %v218
    %v220 = vpack.c.bf16 %v219, %v219
    %v221 = vunpack.c.l.bf16 %v220
    %v222 = vsub.f32 %v219, %v221
    %v223 = vpack.c.bf16 %v222, %v222
    %224 = vmatprep.subr.bf16.mxu0 0
    %225 = vmatpush1.bf16.msra.mxu0 %v111
    %226 = vmatprep.subr.bf16.mxu0 0
    %227 = vmatpush1.bf16.msra.mxu0 %v112
    %228 = vmatprep.subr.bf16.mxu0 0
    %229 = vmatpush1.bf16.msra.mxu0 %v113
    %230 = vmatprep.subr.bf16.mxu0 0
    %231 = vmatpush1.bf16.msra.mxu0 %v114
    %232 = vmatprep.subr.bf16.mxu0 0
    %233 = vmatpush1.bf16.msra.mxu0 %v115
    %234 = vmatprep.subr.bf16.mxu0 0
    %235 = vmatpush1.bf16.msra.mxu0 %v116
    %236 = vmatprep.subr.bf16.mxu0 0
    %237 = vmatpush1.bf16.msra.mxu0 %v117
    %238 = vmatprep.subr.bf16.mxu0 0
    %239 = vmatpush1.bf16.msra.mxu0 %v118
    %240 = vmatprep.subr.bf16.mxu0 0
    %241 = vmatpush1.bf16.msra.mxu0 0
    %242 = vmatprep.subr.bf16.mxu0 0
    %243 = vmatpush1.bf16.msra.mxu0 0
    %244 = vmatprep.subr.bf16.mxu0 0
    %245 = vmatpush1.bf16.msra.mxu0 0
    %246 = vmatprep.subr.bf16.mxu0 0
    %247 = vmatpush1.bf16.msra.mxu0 0
    %248 = vmatprep.subr.bf16.mxu0 0
    %249 = vmatpush1.bf16.msra.mxu0 0
    %250 = vmatprep.subr.bf16.mxu0 0
    %251 = vmatpush1.bf16.msra.mxu0 0
    %252 = vmatprep.subr.bf16.mxu0 0
    %253 = vmatpush1.bf16.msra.mxu0 0
    %254 = vmatprep.subr.bf16.mxu0 0
    %255 = vmatpush1.bf16.msra.mxu0 0
    %256 = vmatprep.mubr.bf16.mxu0 0
    %257 = vmatmul.mubr.bf16.gmra.mrb[0].mxu0 %v223
    %v258 = vpop.f32.mrb[0].mxu0
    %v259 = vadd.f32 0.0, %v258
    %v260 = vpop.f32.mrb[0].mxu0
    %v261 = vpop.f32.mrb[0].mxu0
    %v262 = vpop.f32.mrb[0].mxu0
    %263 = vdwg.mxu0
    %264 = vmatprep.subr.bf16.mxu0 0
    %265 = vmatpush1.bf16.msra.mxu0 %v111
    %266 = vmatprep.subr.bf16.mxu0 0
    %267 = vmatpush1.bf16.msra.mxu0 %v112
    %268 = vmatprep.subr.bf16.mxu0 0
    %269 = vmatpush1.bf16.msra.mxu0 %v113
    %270 = vmatprep.subr.bf16.mxu0 0
    %271 = vmatpush1.bf16.msra.mxu0 %v114
    %272 = vmatprep.subr.bf16.mxu0 0
    %273 = vmatpush1.bf16.msra.mxu0 %v115
    %274 = vmatprep.subr.bf16.mxu0 0
    %275 = vmatpush1.bf16.msra.mxu0 %v116
    %276 = vmatprep.subr.bf16.mxu0 0
    %277 = vmatpush1.bf16.msra.mxu0 %v117
    %278 = vmatprep.subr.bf16.mxu0 0
    %279 = vmatpush1.bf16.msra.mxu0 %v118
    %280 = vmatprep.subr.bf16.mxu0 0
    %281 = vmatpush1.bf16.msra.mxu0 0
    %282 = vmatprep.subr.bf16.mxu0 0
    %283 = vmatpush1.bf16.msra.mxu0 0
    %284 = vmatprep.subr.bf16.mxu0 0
    %285 = vmatpush1.bf16.msra.mxu0 0
    %286 = vmatprep.subr.bf16.mxu0 0
    %287 = vmatpush1.bf16.msra.mxu0 0
    %288 = vmatprep.subr.bf16.mxu0 0
    %289 = vmatpush1.bf16.msra.mxu0 0
    %290 = vmatprep.subr.bf16.mxu0 0
    %291 = vmatpush1.bf16.msra.mxu0 0
    %292 = vmatprep.subr.bf16.mxu0 0
    %293 = vmatpush1.bf16.msra.mxu0 0
    %294 = vmatprep.subr.bf16.mxu0 0
    %295 = vmatpush1.bf16.msra.mxu0 0
    %296 = vmatprep.mubr.bf16.mxu0 0
    %297 = vmatmul.mubr.bf16.gmra.mrb[0].mxu0 %v220
    %v298 = vpop.f32.mrb[0].mxu0
    %v299 = vadd.f32 %v259, %v298
    %v300 = vpop.f32.mrb[0].mxu0
    %v301 = vpop.f32.mrb[0].mxu0
    %v302 = vpop.f32.mrb[0].mxu0
    %303 = vdwg.mxu0
    %v304 = vmul.f32 %v40, %v299
    %v305 = vlaneseq
    %v306 = vshrl.u32 %v305, 7
    %v307 = vsub.s32 1, %v306
    %v308 = vrot.slane %v42, %v307
    %v309 = vadd.f32 %v304, %v308
    %v310 = vadd.f32 %v309, %v214
    %v311 = vlaneseq
    %v312 = vshrl.u32 %v311, 7
    %v313 = vsub.s32 2, %v312
    %v314 = vrot.slane %v41, %v313
    %v315 = vmul.f32 %v310, %v314
    %v316 = vpack.c.bf16 %v315, %v315
    %v317 = vunpack.c.l.bf16 %v316
    %v318 = vsub.f32 %v315, %v317
    %v319 = vpack.c.bf16 %v318, %v318
    %320 = vmatprep.subr.bf16.mxu0 0
    %321 = vmatpush1.bf16.msra.mxu0 %v111
    %322 = vmatprep.subr.bf16.mxu0 0
    %323 = vmatpush1.bf16.msra.mxu0 %v112
    %324 = vmatprep.subr.bf16.mxu0 0
    %325 = vmatpush1.bf16.msra.mxu0 %v113
    %326 = vmatprep.subr.bf16.mxu0 0
    %327 = vmatpush1.bf16.msra.mxu0 %v114
    %328 = vmatprep.subr.bf16.mxu0 0
    %329 = vmatpush1.bf16.msra.mxu0 %v115
    %330 = vmatprep.subr.bf16.mxu0 0
    %331 = vmatpush1.bf16.msra.mxu0 %v116
    %332 = vmatprep.subr.bf16.mxu0 0
    %333 = vmatpush1.bf16.msra.mxu0 %v117
    %334 = vmatprep.subr.bf16.mxu0 0
    %335 = vmatpush1.bf16.msra.mxu0 %v118
    %336 = vmatprep.subr.bf16.mxu0 0
    %337 = vmatpush1.bf16.msra.mxu0 0
    %338 = vmatprep.subr.bf16.mxu0 0
    %339 = vmatpush1.bf16.msra.mxu0 0
    %340 = vmatprep.subr.bf16.mxu0 0
    %341 = vmatpush1.bf16.msra.mxu0 0
    %342 = vmatprep.subr.bf16.mxu0 0
    %343 = vmatpush1.bf16.msra.mxu0 0
    %344 = vmatprep.subr.bf16.mxu0 0
    %345 = vmatpush1.bf16.msra.mxu0 0
    %346 = vmatprep.subr.bf16.mxu0 0
    %347 = vmatpush1.bf16.msra.mxu0 0
    %348 = vmatprep.subr.bf16.mxu0 0
    %349 = vmatpush1.bf16.msra.mxu0 0
    %350 = vmatprep.subr.bf16.mxu0 0
    %351 = vmatpush1.bf16.msra.mxu0 0
    %352 = vmatprep.mubr.bf16.mxu0 0
    %353 = vmatmul.mubr.bf16.gmra.mrb[0].mxu0 %v319
    %v354 = vpop.f32.mrb[0].mxu0
    %v355 = vadd.f32 0.0, %v354
    %v356 = vpop.f32.mrb[0].mxu0
    %v357 = vpop.f32.mrb[0].mxu0
    %v358 = vpop.f32.mrb[0].mxu0
    %359 = vdwg.mxu0
    %360 = vmatprep.subr.bf16.mxu0 0
    %361 = vmatpush1.bf16.msra.mxu0 %v111
    %362 = vmatprep.subr.bf16.mxu0 0
    %363 = vmatpush1.bf16.msra.mxu0 %v112
    %364 = vmatprep.subr.bf16.mxu0 0
    %365 = vmatpush1.bf16.msra.mxu0 %v113
    %366 = vmatprep.subr.bf16.mxu0 0
    %367 = vmatpush1.bf16.msra.mxu0 %v114
    %368 = vmatprep.subr.bf16.mxu0 0
    %369 = vmatpush1.bf16.msra.mxu0 %v115
    %370 = vmatprep.subr.bf16.mxu0 0
    %371 = vmatpush1.bf16.msra.mxu0 %v116
    %372 = vmatprep.subr.bf16.mxu0 0
    %373 = vmatpush1.bf16.msra.mxu0 %v117
    %374 = vmatprep.subr.bf16.mxu0 0
    %375 = vmatpush1.bf16.msra.mxu0 %v118
    %376 = vmatprep.subr.bf16.mxu0 0
    %377 = vmatpush1.bf16.msra.mxu0 0
    %378 = vmatprep.subr.bf16.mxu0 0
    %379 = vmatpush1.bf16.msra.mxu0 0
    %380 = vmatprep.subr.bf16.mxu0 0
    %381 = vmatpush1.bf16.msra.mxu0 0
    %382 = vmatprep.subr.bf16.mxu0 0
    %383 = vmatpush1.bf16.msra.mxu0 0
    %384 = vmatprep.subr.bf16.mxu0 0
    %385 = vmatpush1.bf16.msra.mxu0 0
    %386 = vmatprep.subr.bf16.mxu0 0
    %387 = vmatpush1.bf16.msra.mxu0 0
    %388 = vmatprep.subr.bf16.mxu0 0
    %389 = vmatpush1.bf16.msra.mxu0 0
    %390 = vmatprep.subr.bf16.mxu0 0
    %391 = vmatpush1.bf16.msra.mxu0 0
    %392 = vmatprep.mubr.bf16.mxu0 0
    %393 = vmatmul.mubr.bf16.gmra.mrb[0].mxu0 %v316
    %v394 = vpop.f32.mrb[0].mxu0
    %v395 = vadd.f32 %v355, %v394
    %v396 = vpop.f32.mrb[0].mxu0
    %v397 = vpop.f32.mrb[0].mxu0
    %v398 = vpop.f32.mrb[0].mxu0
    %399 = vdwg.mxu0
    %v400 = vmul.f32 %v40, %v395
    %v401 = vlaneseq
    %v402 = vshrl.u32 %v401, 7
    %v403 = vsub.s32 2, %v402
    %v404 = vrot.slane %v42, %v403
    %v405 = vadd.f32 %v400, %v404
    %v406 = vadd.f32 %v405, %v310
    %407 = vst [vmem:[#allocation7] sm:$0xff] %v406
    // Predicated region
    $region22: #{tpu_custom_call.1} parent=1 // pred_check
      _
    $region23: #{tpu_custom_call.1} parent=1 // pred_check_branch
      %409 = sbr.rel (0) target = $region25
    $region24: #{tpu_custom_call.1} parent=1 // pred_region
      %s411 = ssub.s32 128, 128
      %412 = vsyncadd [#allocation4], %s411
      %s414 = sshll.u32 [#allocation7], 4
      %s415 = int_to_ptr.vmem [resolvable:$true] %s414
      %417 = dma.vmem_to_hbm [thread:$0]  %s415, 128, %s3, [#allocation4]
    $region25: #{tpu_custom_call.1} parent=1 // pred_fallthru
      _
    // Predicated region
    $region26: #{tpu_custom_call.1} parent=1 // pred_check
      _
    $region27: #{tpu_custom_call.1} parent=1 // pred_check_branch
      %419 = sbr.rel (0) target = $region29
    $region28: #{tpu_custom_call.1} parent=1 // pred_region
      %420 = dma.done [#allocation4], 128
    $region29: #{tpu_custom_call.1} parent=1 // pred_fallthru
      _
    %421 = vsyncpa [#allocation3], 1
    %422 = vsyncpa [#allocation6], 1
    %423 = vsyncpa [#allocation4], 1

</llo_original>
